<compile_context>
chip_gen: v7x
topology: tpu7x:2x2x1
jax: 0.10.0
libtpu: 0.0.40
codegen_flags: <defaults>
</compile_context>

<pallas_src>
import jax
import jax.numpy as jnp
from jax import lax
from jax.experimental import pallas as pl
from jax.experimental.pallas import tpu as pltpu


_VMEM_LIMIT_BYTES = 48 << 20   # scoped VMEM requested from Mosaic (<= v7x 64 MiB physical)
_VMEM_TILE_BUDGET = 24 << 20   # target live footprint used when sizing the batch tile


def attn_kernel(x_ref, w1_ref, b1_ref, w2_ref, out_ref):
    # x_ref : (TB, T, H) streamed tile (native dtype)
    # w1_ref: (H, 256)   scorer weight, already in the MXU dtype (bf16)
    # b1_ref: (1, 256)   scorer bias, f32
    # w2_ref: (1, 256)   score-projection weight row, f32
    TB, T, H = x_ref.shape
    HID = w1_ref.shape[1]

    x = x_ref[...]                                   # (TB, T, H)
    xf = x.astype(jnp.float32)

    # --- scorer MLP stage 1 on the MXU: bf16 inputs, f32 accumulation --------
    x2d = x.reshape(TB * T, H).astype(w1_ref.dtype)
    h = jnp.dot(x2d, w1_ref[...], preferred_element_type=jnp.float32)
    h = jnp.maximum(h + b1_ref[...].astype(jnp.float32), 0.0)       # (TB*T, 256)

    # --- stage 2 (256 -> 1) on the VPU: multiply by the weight row + lane
    #     reduce; avoids a degenerate N=1 MXU matmul. -------------------------
    h3 = h.reshape(TB, T, HID)
    w2row = w2_ref[...].astype(jnp.float32).reshape(1, 1, HID)
    scores = jnp.sum(h3 * w2row, axis=-1, keepdims=True)            # (TB, T, 1)
    # Linear(256,1).bias is softmax-invariant -> intentionally omitted.

    # --- numerically stable softmax over time (sublane axis), all f32 --------
    m = jnp.max(scores, axis=1, keepdims=True)
    e = jnp.exp(scores - m)
    attn = e / jnp.sum(e, axis=1, keepdims=True)                    # (TB, T, 1)

    # --- attention-weighted sum over time on the VPU (multiply + sublane
    #     reduce); matches the reference computation exactly in f32. ----------
    out_ref[...] = jnp.sum(xf * attn, axis=1).astype(out_ref.dtype)


def _round_up(n, m):
    return (n + m - 1) // m * m


def _pick_batch_block(batch, seq, hdim, x_itemsize, hid,
                      *, vmem_tile_budget=_VMEM_TILE_BUDGET, min_grid_steps=2):
    """Batch rows per grid step, with honest VMEM accounting.

    Counts (per batch row of the tile): the (8,128)-padded, double-buffered x
    block, the bf16 MXU copy of x, the dominant (TB*T, 256) f32 scorer
    activation, and the f32 x*attn product; plus the resident weights.  The
    result is kept 8-aligned (or equal to the full batch) so the (TB, H)
    output block satisfies the (8,128) rule, and capped so the grid has at
    least `min_grid_steps` steps (lets the "parallel" batch axis shard across
    the two v7x TensorCores; harmless on single-TC v5e/v6e).
    """
    x_tile = 2 * _round_up(seq, 8) * _round_up(hdim, 128) * x_itemsize   # double-buffered stream
    x_bf16 = seq * _round_up(hdim, 128) * 2                              # MXU input copy
    h_act = _round_up(seq, 8) * _round_up(hid, 128) * 4                  # f32 scorer activation
    w_prod = _round_up(seq, 8) * _round_up(hdim, 128) * 4                # f32 x * attn product
    per_row = x_tile + x_bf16 + h_act + w_prod

    fixed = 2 * (_round_up(hdim, 8) * _round_up(hid, 128) * 2            # resident w1 (bf16)
                 + 2 * 8 * _round_up(hid, 128) * 4)                      # b1 + w2 rows (f32)

    tb = max(1, (vmem_tile_budget - fixed) // per_row)
    if min_grid_steps > 1:
        tb = min(tb, pl.cdiv(batch, min_grid_steps))
    if tb >= batch:
        return int(batch)
    tb = (tb // 8) * 8            # 8-aligned output block; also makes M = TB*T a multiple of 8
    return int(tb) if tb > 0 else int(batch)


def attn_forward(x, w1, b1, w2, b2=None, *, batch_block=None,
                 scorer_matmul_dtype=jnp.bfloat16, x_buffer_count=None,
                 min_grid_steps=2, vmem_limit_bytes=_VMEM_LIMIT_BYTES):
    """Forward pass of Attn.  x: (B, T, h_dim); w1: (h_dim, 256) (= torch W1.T);
    b1: (256,)/(1,256); w2: (256, 1) (= torch W2.T).  b2 is accepted for
    signature fidelity but never enters the kernel (softmax-invariant).
    Pass scorer_matmul_dtype=jnp.float32 for a full-precision scorer matmul."""
    B, T, H = x.shape
    HID = w1.shape[1]

    w1_c = jnp.asarray(w1).astype(scorer_matmul_dtype)
    b1_r = jnp.asarray(b1, jnp.float32).reshape(1, HID)
    w2_row = jnp.asarray(w2, jnp.float32).reshape(1, HID)

    TB = batch_block if batch_block is not None else _pick_batch_block(
        B, T, H, x.dtype.itemsize, HID, min_grid_steps=min_grid_steps)
    grid = (pl.cdiv(B, TB),)
    # Note: if B % TB != 0, the trailing out-of-bounds rows of the last block
    # may compute inf/NaN locally, but each row is independent and their
    # writeback is discarded, so valid rows are unaffected.

    x_spec_kwargs = {}
    if x_buffer_count is not None:            # deeper pipelining for DMA-exposed v5e
        x_spec_kwargs["pipeline_mode"] = pl.Buffered(x_buffer_count)
    x_spec = pl.BlockSpec((TB, T, H), lambda b: (b, 0, 0), **x_spec_kwargs)

    flops = (2 * B * T * H * HID      # scorer matmul
             + 4 * B * T * HID        # bias + relu + 256->1 projection
             + 2 * B * T * H          # weighted sum over time
             + 6 * B * T)             # softmax
    bytes_accessed = (x.size * x.dtype.itemsize
                      + w1_c.size * w1_c.dtype.itemsize
                      + b1_r.size * 4 + w2_row.size * 4
                      + B * H * x.dtype.itemsize)

    return pl.pallas_call(
        attn_kernel,
        out_shape=jax.ShapeDtypeStruct((B, H), x.dtype),
        grid=grid,
        in_specs=[
            x_spec,                                          # streamed x tile
            pl.BlockSpec((H, HID), lambda b: (0, 0)),        # resident weights
            pl.BlockSpec((1, HID), lambda b: (0, 0)),
            pl.BlockSpec((1, HID), lambda b: (0, 0)),
        ],
        out_specs=pl.BlockSpec((TB, H), lambda b: (b, 0)),
        compiler_params=pltpu.CompilerParams(
            dimension_semantics=("parallel",),
            vmem_limit_bytes=vmem_limit_bytes),
        cost_estimate=pl.CostEstimate(
            flops=flops, transcendentals=B * T,
            bytes_accessed=bytes_accessed),
    )(x, w1_c, b1_r, w2_row)


def attn_reference(x, w1, b1, w2, b2):
    """Faithful f32 translation of the PyTorch module (HIGHEST matmul precision
    so the reference itself is not subject to TPU default-precision bf16)."""
    B, T, H = x.shape
    h = jnp.maximum(
        jnp.dot(x.reshape(B * T, H), w1, precision=lax.Precision.HIGHEST) + b1, 0.0)
    scores = (jnp.dot(h, w2, precision=lax.Precision.HIGHEST) + b2).reshape(B, T)
    attn = jax.nn.softmax(scores, axis=1)[:, :, None]
    return jnp.sum(x * attn, axis=1)


if __name__ == "__main__":
    B, T, H = 2, 8, 32      # batch, seq, h_dim
    HID = 256               # hidden width of nn.Linear(h_dim, 256)

    key = jax.random.PRNGKey(0)
    kx, k1, k2, k3, k4 = jax.random.split(key, 5)

    # Deterministic parameter init (PyTorch-Linear-style uniform bounds).
    bound1 = 1.0 / jnp.sqrt(H)
    bound2 = 1.0 / jnp.sqrt(HID)
    x = jax.random.normal(kx, (B, T, H), dtype=jnp.float32)
    w1 = jax.random.uniform(k1, (H, HID), jnp.float32, -bound1, bound1)   # Linear(h_dim,256).weight.T
    b1 = jax.random.uniform(k2, (1, HID), jnp.float32, -bound1, bound1)   # Linear(h_dim,256).bias
    w2 = jax.random.uniform(k3, (HID, 1), jnp.float32, -bound2, bound2)   # Linear(256,1).weight.T
    b2 = jax.random.uniform(k4, (1, 1), jnp.float32, -bound2, bound2)     # Linear(256,1).bias

    feats = jax.block_until_ready(attn_forward(x, w1, b1, w2, b2))
    ref = attn_reference(x, w1, b1, w2, b2)

    assert feats.shape == (B, H)
    # Only intentional numeric deviation: the scorer matmul runs in bf16 with
    # f32 accumulation (per-gen MXU fast path); everything downstream is f32.
    # Expected deviation from the f32 reference is O(1e-3) absolute here.
    max_err = float(jnp.max(jnp.abs(feats - ref)))
    assert jnp.allclose(feats, ref, atol=1e-2, rtol=1e-2), (
        f"mismatch vs JAX reference (max_abs_err={max_err})")

    print("KERNEL_OK")
</pallas_src>

<mosaic_0001>
module attributes {stable_mosaic.version = 11 : i64} {
  func.func @attn_kernel(%arg0: i32, %arg1: memref<2x8x32xf32, #tpu.memory_space<vmem>>, %arg2: memref<32x256xbf16, #tpu.memory_space<vmem>>, %arg3: memref<1x256xf32, #tpu.memory_space<vmem>>, %arg4: memref<1x256xf32, #tpu.memory_space<vmem>>, %arg5: memref<2x32xf32, #tpu.memory_space<vmem>>) attributes {dimension_semantics = [#tpu.dimension_semantics<parallel>], iteration_bounds = array<i64: 1>, scalar_prefetch = 0 : i64, scratch_operands = 0 : i64, tpu.core_type = #tpu.core_type<tc>, window_params = [{transform_indices = @transform_0, window_bounds = array<i64: 2, 8, 32>}, {pipeline_mode = #tpu.pipeline_mode<synchronous>, transform_indices = @transform_1, window_bounds = array<i64: 32, 256>}, {pipeline_mode = #tpu.pipeline_mode<synchronous>, transform_indices = @transform_2, window_bounds = array<i64: 1, 256>}, {pipeline_mode = #tpu.pipeline_mode<synchronous>, transform_indices = @transform_3, window_bounds = array<i64: 1, 256>}, {transform_indices = @transform_4, window_bounds = array<i64: 2, 32>}]} {
    %c0 = arith.constant 0 : index
    %c0_0 = arith.constant 0 : index
    %c0_1 = arith.constant 0 : index
    %0 = vector.load %arg1[%c0, %c0_0, %c0_1] : memref<2x8x32xf32, #tpu.memory_space<vmem>>, vector<2x8x32xf32>
    %1 = vector.shape_cast %0 : vector<2x8x32xf32> to vector<16x32xf32>
    %2 = arith.truncf %1 : vector<16x32xf32> to vector<16x32xbf16>
    %c0_2 = arith.constant 0 : index
    %c0_3 = arith.constant 0 : index
    %3 = vector.load %arg2[%c0_2, %c0_3] : memref<32x256xbf16, #tpu.memory_space<vmem>>, vector<32x256xbf16>
    %cst = arith.constant dense<0.000000e+00> : vector<16x256xf32>
    %4 = tpu.matmul %2, %3, %cst {dimension_numbers = #tpu.dot_dimension_numbers<[1], [0], [0], [1], [0, 0, 1, 1], [], []>} : vector<16x32xbf16>, vector<32x256xbf16>, vector<16x256xf32> -> vector<16x256xf32>
    %c0_4 = arith.constant 0 : index
    %c0_5 = arith.constant 0 : index
    %5 = vector.load %arg3[%c0_4, %c0_5] : memref<1x256xf32, #tpu.memory_space<vmem>>, vector<1x256xf32>
    %6 = vector.broadcast %5 : vector<1x256xf32> to vector<16x256xf32>
    %7 = arith.addf %4, %6 : vector<16x256xf32>
    %cst_6 = arith.constant 0.000000e+00 : f32
    %8 = vector.broadcast %cst_6 : f32 to vector<16x256xf32>
    %9 = arith.maximumf %7, %8 : vector<16x256xf32>
    %10 = vector.shape_cast %9 : vector<16x256xf32> to vector<2x8x256xf32>
    %c0_7 = arith.constant 0 : index
    %c0_8 = arith.constant 0 : index
    %11 = vector.load %arg4[%c0_7, %c0_8] : memref<1x256xf32, #tpu.memory_space<vmem>>, vector<1x256xf32>
    %12 = vector.shape_cast %11 : vector<1x256xf32> to vector<1x1x256xf32>
    %13 = vector.broadcast %12 : vector<1x1x256xf32> to vector<2x8x256xf32>
    %14 = arith.mulf %10, %13 : vector<2x8x256xf32>
    %cst_9 = arith.constant dense<0.000000e+00> : vector<2x8xf32>
    %15 = vector.multi_reduction <add>, %14, %cst_9 [2] : vector<2x8x256xf32> to vector<2x8xf32>
    %16 = vector.shape_cast %15 : vector<2x8xf32> to vector<2x8x1xf32>
    %cst_10 = arith.constant dense<0xFF800000> : vector<2x1xf32>
    %17 = vector.multi_reduction <maximumf>, %16, %cst_10 [1] : vector<2x8x1xf32> to vector<2x1xf32>
    %18 = vector.shape_cast %17 : vector<2x1xf32> to vector<2x1x1xf32>
    %19 = vector.broadcast %18 : vector<2x1x1xf32> to vector<2x8x1xf32>
    %20 = arith.subf %16, %19 : vector<2x8x1xf32>
    %21 = math.exp %20 : vector<2x8x1xf32>
    %cst_11 = arith.constant dense<0.000000e+00> : vector<2x1xf32>
    %22 = vector.multi_reduction <add>, %21, %cst_11 [1] : vector<2x8x1xf32> to vector<2x1xf32>
    %23 = vector.shape_cast %22 : vector<2x1xf32> to vector<2x1x1xf32>
    %24 = vector.broadcast %23 : vector<2x1x1xf32> to vector<2x8x1xf32>
    %25 = arith.divf %21, %24 : vector<2x8x1xf32>
    %26 = vector.broadcast %25 : vector<2x8x1xf32> to vector<2x8x32xf32>
    %27 = arith.mulf %0, %26 : vector<2x8x32xf32>
    %cst_12 = arith.constant dense<0.000000e+00> : vector<2x32xf32>
    %28 = vector.multi_reduction <add>, %27, %cst_12 [1] : vector<2x8x32xf32> to vector<2x32xf32>
    %c0_13 = arith.constant 0 : index
    %c0_14 = arith.constant 0 : index
    %29 = vector.load %arg5[%c0_13, %c0_14] : memref<2x32xf32, #tpu.memory_space<vmem>>, vector<2x32xf32>
    tpu.vector_store %arg5[%c0_13, %c0_14], %28 {strides = array<i32>} : memref<2x32xf32, #tpu.memory_space<vmem>>, vector<2x32xf32>,
    return
  }
  func.func @transform_0(%arg0: i32) -> (i32, i32, i32) {
    %c0_i32 = arith.constant 0 : i32
    %c0_i32_0 = arith.constant 0 : i32
    %c0_i32_1 = arith.constant 0 : i32
    return %arg0, %c0_i32, %c0_i32_0 : i32, i32, i32
  }
  func.func @transform_1(%arg0: i32) -> (i32, i32) {
    %c0_i32 = arith.constant 0 : i32
    %c0_i32_0 = arith.constant 0 : i32
    %c0_i32_1 = arith.constant 0 : i32
    return %c0_i32, %c0_i32_0 : i32, i32
  }
  func.func @transform_2(%arg0: i32) -> (i32, i32) {
    %c0_i32 = arith.constant 0 : i32
    %c0_i32_0 = arith.constant 0 : i32
    %c0_i32_1 = arith.constant 0 : i32
    return %c0_i32, %c0_i32_0 : i32, i32
  }
  func.func @transform_3(%arg0: i32) -> (i32, i32) {
    %c0_i32 = arith.constant 0 : i32
    %c0_i32_0 = arith.constant 0 : i32
    %c0_i32_1 = arith.constant 0 : i32
    return %c0_i32, %c0_i32_0 : i32, i32
  }
  func.func @transform_4(%arg0: i32) -> (i32, i32) {
    %c0_i32 = arith.constant 0 : i32
    %c0_i32_0 = arith.constant 0 : i32
    return %arg0, %c0_i32 : i32, i32
  }
}

</mosaic_0001>

<llo_original>
// kernel: tpu_custom_call.1
$region0: #{tpu_custom_call.1}
  #allocation0 [shape = 'u32[]', space=smem, size = 0x4, offset = 0x4, fixed_abs, tag = 'smem constant byte address 0x4 - core index']
  #allocation1 [shape = 'u32[144,128]{1,0:T(1,128)}', space=vmem, size = 0x12000, scoped, tag = 'internal scratch']
  %s0 = inlined_call_operand.hbm [shape: f32[2,8,32], index: 0, kind: input, shape index: {}]
  %s1 = inlined_call_operand.hbm [shape: bf16[32,256], index: 1, kind: input, shape index: {}]
  %s2 = inlined_call_operand.vmem [shape: f32[1,256], index: 2, kind: input, shape index: {}]
  %s3 = inlined_call_operand.vmem [shape: f32[1,256], index: 3, kind: input, shape index: {}]
  %s4 = inlined_call_operand.hbm [shape: f32[2,32], index: 4, kind: output, shape index: {}]
  %s5 = sld [smem:[#allocation0]]
  $region34: #{tpu_custom_call.1} parent=0
    _
  %s7 = ssub.s32 1, %s5
  %s8 = scalar_select 0, %s7, %s5
  $region1: #{tpu_custom_call.1} parent=0
    #allocation2 [shape = 'u8[8192]{0}', space=vmem, size = 0x2000, scoped, tag = 'input window, operand 0, single buffered']
    #allocation3 [shape = 's32[1]{0}', space=sflag, size = 0x4, scoped, tag = 'scoped memory for tpu_custom_call.1']
    #allocation4 [shape = 's32[1]{0}', space=sflag, size = 0x4, scoped, tag = 'scoped memory for tpu_custom_call.1']
    #allocation5 [shape = 'u8[16384]{0}', space=vmem, size = 0x4000, scoped, tag = 'input window, operand 1, single buffered']
    #allocation6 [shape = 's32[1]{0}', space=sflag, size = 0x4, scoped, tag = 'scoped memory for tpu_custom_call.1']
    #allocation7 [shape = 'u8[1024]{0}', space=vmem, size = 0x400, scoped, tag = 'output window, operand 0, single buffered']
    %9 = vsyncpa [#allocation3], 0
    %10 = vsyncpa [#allocation6], 0
    %11 = vsyncpa [#allocation4], 0
    // Predicated region
    $region2: #{tpu_custom_call.1} parent=1 // pred_check
      _
    $region3: #{tpu_custom_call.1} parent=1 // pred_check_branch
      %13 = sbr.rel (0) target = $region5
    $region4: #{tpu_custom_call.1} parent=1 // pred_region
      %s15 = ssub.s32 256, 256
      %16 = vsyncadd [#allocation3], %s15
      %s17 = sshll.u32 [#allocation2], 4
      %s18 = int_to_ptr.vmem [resolvable:$true] %s17
      %23 = dma.hbm_to_vmem [thread:$0]  %s0, 256, %s18, [#allocation3], 128, 128, 8
    $region5: #{tpu_custom_call.1} parent=1 // pred_fallthru
      _
    // Predicated region
    $region6: #{tpu_custom_call.1} parent=1 // pred_check
      _
    $region7: #{tpu_custom_call.1} parent=1 // pred_check_branch
      %25 = sbr.rel (0) target = $region9
    $region8: #{tpu_custom_call.1} parent=1 // pred_region
      %s27 = ssub.s32 512, 512
      %28 = vsyncadd [#allocation6], %s27
      %s29 = sshll.u32 [#allocation5], 4
      %s30 = int_to_ptr.vmem [resolvable:$true] %s29
      %35 = dma.hbm_to_vmem [thread:$0]  %s1, 512, %s30, [#allocation6], 128, 128, 8
    $region9: #{tpu_custom_call.1} parent=1 // pred_fallthru
      _
    // Predicated region
    $region10: #{tpu_custom_call.1} parent=1 // pred_check
      _
    $region11: #{tpu_custom_call.1} parent=1 // pred_check_branch
      %37 = sbr.rel (0) target = $region13
    $region12: #{tpu_custom_call.1} parent=1 // pred_region
      _
    $region13: #{tpu_custom_call.1} parent=1 // pred_fallthru
      _
    // Predicated region
    $region14: #{tpu_custom_call.1} parent=1 // pred_check
      _
    $region15: #{tpu_custom_call.1} parent=1 // pred_check_branch
      %39 = sbr.rel (0) target = $region17
    $region16: #{tpu_custom_call.1} parent=1 // pred_region
      _
    $region17: #{tpu_custom_call.1} parent=1 // pred_fallthru
      _
    // Predicated region
    $region18: #{tpu_custom_call.1} parent=1 // pred_check
      _
    $region19: #{tpu_custom_call.1} parent=1 // pred_check_branch
      %41 = sbr.rel (0) target = $region21
    $region20: #{tpu_custom_call.1} parent=1 // pred_region
      %42 = dma.done [#allocation3], 256
    $region21: #{tpu_custom_call.1} parent=1 // pred_fallthru
      _
    // Predicated region
    $region22: #{tpu_custom_call.1} parent=1 // pred_check
      _
    $region23: #{tpu_custom_call.1} parent=1 // pred_check_branch
      %44 = sbr.rel (0) target = $region25
    $region24: #{tpu_custom_call.1} parent=1 // pred_region
      %45 = dma.done [#allocation6], 512
    $region25: #{tpu_custom_call.1} parent=1 // pred_fallthru
      _
    %v47 = vld [vmem:[#allocation2] sm:$0xff]
    %v48 = vld [vmem:[#allocation2 + $0x8] sm:$0xff]
    %v49 = vpack.c.bf16 %v48, %v47
    %v50 = vld [vmem:[#allocation5] sm:$0xff]
    %v51 = vld [vmem:[#allocation5 + $0x8] sm:$0xff]
    %v52 = vld [vmem:[#allocation5 + $0x10] sm:$0xff]
    %v53 = vld [vmem:[#allocation5 + $0x18] sm:$0xff]
    %v54 = vld [vmem:[%s2] sm:$0x3]
    %v56 = vlaneseq
    %v57 = vshrl.u32 %v56, 7
    %v58 = vsub.s32 0, %v57
    %v59 = vrot.slane %v54, %v58
    %v60 = vlaneseq
    %v61 = vshrl.u32 %v60, 7
    %v62 = vsub.s32 1, %v61
    %v63 = vrot.slane %v54, %v62
    %v70 = vunpack.c.l.b16 %v50
    %v71 = vunpack.c.h.b16 %v50
    %v72 = vunpack.c.l.b16 %v51
    %v73 = vunpack.c.h.b16 %v51
    %v74 = vunpack.c.l.b16 %v52
    %v75 = vunpack.c.h.b16 %v52
    %v76 = vunpack.c.l.b16 %v53
    %v77 = vunpack.c.h.b16 %v53
    %v78 = vpack.c.b16 %v72, %v70
    %v79 = vpack.c.b16 %v73, %v71
    %v80 = vpack.c.b16 %v76, %v74
    %v81 = vpack.c.b16 %v77, %v75
    %vm86 = vcmask 261120
    %v88 = vsel %vm86, %v49, 0
    %90 = vmatprep.subr.bf16.mxu0 %v79
    %91 = vmatpush1.bf16.msra.mxu0 %v78
    %92 = vmatprep.subr.bf16.mxu0 %v81
    %93 = vmatpush1.bf16.msra.mxu0 %v80
    %94 = vmatprep.subr.bf16.mxu0 0
    %95 = vmatpush1.bf16.msra.mxu0 0
    %96 = vmatprep.subr.bf16.mxu0 0
    %97 = vmatpush1.bf16.msra.mxu0 0
    %98 = vmatprep.subr.bf16.mxu0 0
    %99 = vmatpush1.bf16.msra.mxu0 0
    %100 = vmatprep.subr.bf16.mxu0 0
    %101 = vmatpush1.bf16.msra.mxu0 0
    %102 = vmatprep.subr.bf16.mxu0 0
    %103 = vmatpush1.bf16.msra.mxu0 0
    %104 = vmatprep.subr.bf16.mxu0 0
    %105 = vmatpush1.bf16.msra.mxu0 0
    %106 = vmatprep.subr.bf16.mxu0 0
    %107 = vmatpush1.bf16.msra.mxu0 0
    %108 = vmatprep.subr.bf16.mxu0 0
    %109 = vmatpush1.bf16.msra.mxu0 0
    %110 = vmatprep.subr.bf16.mxu0 0
    %111 = vmatpush1.bf16.msra.mxu0 0
    %112 = vmatprep.subr.bf16.mxu0 0
    %113 = vmatpush1.bf16.msra.mxu0 0
    %114 = vmatprep.subr.bf16.mxu0 0
    %115 = vmatpush1.bf16.msra.mxu0 0
    %116 = vmatprep.subr.bf16.mxu0 0
    %117 = vmatpush1.bf16.msra.mxu0 0
    %118 = vmatprep.subr.bf16.mxu0 0
    %119 = vmatpush1.bf16.msra.mxu0 0
    %120 = vmatprep.subr.bf16.mxu0 0
    %121 = vmatpush1.bf16.msra.mxu0 0
    %122 = vmatprep.mubr.bf16.mxu0 0
    %123 = vmatmul.mubr.bf16.gmra.mrb[0].mxu0 %v88
    %v124 = vpop.f32.mrb[0].mxu0
    %v125 = vadd.f32 %v59, %v124
    %v126 = vpop.f32.mrb[0].mxu0
    %v127 = vadd.f32 %v63, %v126
    %v128 = vpop.f32.mrb[0].mxu0
    %v129 = vadd.f32 %v59, %v128
    %v130 = vpop.f32.mrb[0].mxu0
    %v131 = vadd.f32 %v63, %v130
    %132 = vdwg.mxu0
    %v133 = vmax.f32 %v125, 0.0
    %v134 = vmax.f32 %v127, 0.0
    %v135 = vmax.f32 %v129, 0.0
    %v136 = vmax.f32 %v131, 0.0
    %v137 = vld [vmem:[%s3] sm:$0x3]
    %v139 = vlaneseq
    %v140 = vshrl.u32 %v139, 7
    %v141 = vsub.s32 0, %v140
    %v142 = vrot.slane %v137, %v141
    %v143 = vlaneseq
    %v144 = vshrl.u32 %v143, 7
    %v145 = vsub.s32 1, %v144
    %v146 = vrot.slane %v137, %v145
    %v149 = vmul.f32 %v133, %v142
    %v150 = vmul.f32 %v134, %v146
    %v151 = vmul.f32 %v135, %v142
    %v152 = vmul.f32 %v136, %v146
    %v153 = vadd.f32 %v149, %v150
    %154 = vadd.xlane.f32.xlu0 %v153
    %v155 = vpop.xlane.xlu0 %154
    %v156 = vadd.f32 %v151, %v152
    %157 = vadd.xlane.f32.xlu0 %v156
    %v158 = vpop.xlane.xlu0 %157
    %v159 = vrot.slane %v155, 4
    %v160 = vmax.f32 %v155, %v159
    %v161 = vrot.slane %v160, 2
    %v162 = vmax.f32 %v160, %v161
    %v163 = vrot.slane %v162, 1
    %v164 = vmax.f32 %v162, %v163
    %v165 = vrot.slane %v158, 4
    %v166 = vmax.f32 %v158, %v165
    %v167 = vrot.slane %v166, 2
    %v168 = vmax.f32 %v166, %v167
    %v169 = vrot.slane %v168, 1
    %v170 = vmax.f32 %v168, %v169
    %v171 = vsub.f32 %v155, %v164
    %v172 = vsub.f32 %v158, %v170
    %v173 = vmul.f32 %v171, 1.442695
    %v174 = vpow.pop %v173
    %v175 = vmul.f32 %v172, 1.442695
    %v176 = vpow.pop %v175
    %v177 = vrot.slane %v174, 4
    %v178 = vadd.f32 %v174, %v177
    %v179 = vrot.slane %v178, 2
    %v180 = vadd.f32 %v178, %v179
    %v181 = vrot.slane %v180, 1
    %v182 = vadd.f32 %v180, %v181
    %v183 = vrot.slane %v176, 4
    %v184 = vadd.f32 %v176, %v183
    %v185 = vrot.slane %v184, 2
    %v186 = vadd.f32 %v184, %v185
    %v187 = vrot.slane %v186, 1
    %v188 = vadd.f32 %v186, %v187
    %v189 = vrcp.pop %v182
    %v190 = vmul.f32 %v174, %v189
    %v191 = vrcp.pop %v188
    %v192 = vmul.f32 %v176, %v191
    %v193 = vmul.f32 %v47, %v190
    %v194 = vmul.f32 %v48, %v192
    %v195 = vsel %vm86, %v193, 0.0
    %v196 = vrot.slane %v195, 4
    %v197 = vadd.f32 %v195, %v196
    %v198 = vrot.slane %v197, 2
    %v199 = vadd.f32 %v197, %v198
    %v200 = vrot.slane %v199, 1
    %v201 = vadd.f32 %v199, %v200
    %v202 = vsel %vm86, %v194, 0.0
    %v203 = vrot.slane %v202, 4
    %v204 = vadd.f32 %v202, %v203
    %v205 = vrot.slane %v204, 2
    %v206 = vadd.f32 %v204, %v205
    %v207 = vrot.slane %v206, 1
    %v208 = vadd.f32 %v206, %v207
    %vm211 = vcmask 1041409
    %v212 = vsel %vm211, %v208, %v201
    %vm214 = vcmask 254976
    %215 = vst.msk [vmem:[#allocation7] sm:$0x3] %vm214, %v212
    // Predicated region
    $region26: #{tpu_custom_call.1} parent=1 // pred_check
      _
    $region27: #{tpu_custom_call.1} parent=1 // pred_check_branch
      %217 = sbr.rel (0) target = $region29
    $region28: #{tpu_custom_call.1} parent=1 // pred_region
      %s219 = ssub.s32 32, 32
      %220 = vsyncadd [#allocation4], %s219
      %s222 = sshll.u32 [#allocation7], 4
      %s223 = int_to_ptr.vmem [resolvable:$true] %s222
      %225 = dma.vmem_to_hbm [thread:$0]  %s223, 32, %s4, [#allocation4]
    $region29: #{tpu_custom_call.1} parent=1 // pred_fallthru
      _
    // Predicated region
    $region30: #{tpu_custom_call.1} parent=1 // pred_check
      _
    $region31: #{tpu_custom_call.1} parent=1 // pred_check_branch
      %227 = sbr.rel (0) target = $region33
    $region32: #{tpu_custom_call.1} parent=1 // pred_region
      %228 = dma.done [#allocation4], 32
    $region33: #{tpu_custom_call.1} parent=1 // pred_fallthru
      _
    %229 = vsyncpa [#allocation3], 1
    %230 = vsyncpa [#allocation6], 1
    %231 = vsyncpa [#allocation4], 1

</llo_original>
